<compile_context>
chip_gen: v6e
topology: v6e:2x2x1
jax: 0.10.0
libtpu: 0.0.40
codegen_flags: <defaults>
</compile_context>

<pallas_src>
import math

import jax
import jax.numpy as jnp
from jax.experimental import pallas as pl
from jax.experimental.pallas import tpu as pltpu

LANES = 128
# ~1 MiB per tile: double-buffered input + output = <= 4 MiB of VMEM, leaving
# ample headroom on every generation while staying near the HBM roofline.
TILE_BYTE_CAP = 1 << 20


def _resolve_shape(target_shape, total_elems):
    """Resolve a single -1 dim, mimicking torch.Tensor.view semantics."""
    target_shape = tuple(int(s) for s in target_shape)
    if target_shape.count(-1) > 1:
        raise ValueError("only one dimension can be inferred (-1)")
    if -1 in target_shape:
        known = 1
        for s in target_shape:
            if s != -1:
                known *= s
        if known == 0 or total_elems % known != 0:
            raise ValueError(f"cannot reshape {total_elems} elems into {target_shape}")
        target_shape = tuple(total_elems // known if s == -1 else s for s in target_shape)
    if math.prod(target_shape) != total_elems:
        raise ValueError(f"shape {target_shape} is invalid for input of size {total_elems}")
    return target_shape


def _copy_kernel(x_ref, o_ref):
    # Identity copy of the current (tile_rows, cols) lane-dense slab.
    o_ref[...] = x_ref[...]


def _min_sublanes(dtype):
    # Native sublane tiling: 8 for 32-bit, 16 for 16-bit, 32 for 8-bit dtypes.
    itemsize = jnp.dtype(dtype).itemsize
    return {4: 8, 2: 16, 1: 32}.get(itemsize, 8)


def pallas_reshape(x, *target_shape):
    """Equivalent of Reshape(*target_shape)(x) == x.view(target_shape)."""
    total = math.prod(x.shape)
    out_shape = _resolve_shape(target_shape, total)
    itemsize = jnp.dtype(x.dtype).itemsize
    min_sub = _min_sublanes(x.dtype)

    # ---- lay the contiguous element stream out as a lane-dense 2-D slab ----
    if total % (min_sub * LANES) == 0:
        # Aligned bulk path: pick the widest lane-dense last dim (up to 2048)
        # that keeps the row count a multiple of the native sublane tiling.
        cols = LANES
        for c in (2048, 1024, 512, 256):
            if total % c == 0 and (total // c) % min_sub == 0:
                cols = c
                break
        rows = total // cols
        flat = jnp.reshape(x, (rows, cols))          # glue: no data movement
        padded_total = total
    else:
        # Ragged path: pad the flat stream to a full (min_sub, 128)-aligned
        # slab (glue copy for the small tail only), copy tiled, slice after.
        cols = LANES
        rows = pl.cdiv(total, cols)
        rows = ((rows + min_sub - 1) // min_sub) * min_sub
        padded_total = rows * cols
        flat = jnp.pad(jnp.reshape(x, (total,)), (0, padded_total - total))
        flat = jnp.reshape(flat, (rows, cols))

    # ---- pick the row tile: native-aligned, <= 1 MiB, keep >= 2 grid steps
    # when the array allows it (so both v7x TensorCores get a share). ----
    tile_rows = min_sub
    while (rows % (tile_rows * 2) == 0
           and (tile_rows * 2) * cols * itemsize <= TILE_BYTE_CAP
           and rows // (tile_rows * 2) >= 2):
        tile_rows *= 2
    grid = (rows // tile_rows,)

    copied = pl.pallas_call(
        _copy_kernel,
        out_shape=jax.ShapeDtypeStruct((rows, cols), x.dtype),
        grid_spec=pltpu.PrefetchScalarGridSpec(
            num_scalar_prefetch=0,
            grid=grid,
            in_specs=[pl.BlockSpec((tile_rows, cols), lambda i: (i, 0))],
            out_specs=pl.BlockSpec((tile_rows, cols), lambda i: (i, 0)),
        ),
        compiler_params=pltpu.CompilerParams(
            dimension_semantics=("parallel",),
        ),
        # Let XLA donate the (flat) input buffer to the output: the identity
        # write-in-place is safe and halves the HBM footprint when the source
        # buffer is dead after the reshape (the common case inside a model).
        input_output_aliases={0: 0},
        cost_estimate=pl.CostEstimate(
            flops=0,
            transcendentals=0,
            bytes_accessed=2 * padded_total * itemsize,
        ),
    )(flat)

    # Glue: drop padding (if any) and reinterpret with the target shape.
    if padded_total != total:
        copied = jnp.reshape(copied, (padded_total,))[:total]
    return jnp.reshape(copied, out_shape)


if __name__ == "__main__":
    key = jax.random.PRNGKey(0)
    # Small NCHW-like input consistent with typical usage of Reshape.
    x = jax.random.normal(key, (2, 4, 16, 16), dtype=jnp.float32)

    # Reshape(2, 4, -1): flatten the spatial dims, as x.view(2, 4, -1) would.
    y = jax.block_until_ready(pallas_reshape(x, 2, 4, -1))
    ref = jnp.reshape(x, (2, 4, 256))
    assert y.shape == (2, 4, 256), y.shape
    assert y.dtype == x.dtype
    assert bool(jnp.array_equal(y, ref))

    # Fully specified target shape: Reshape(8, 256).
    y2 = jax.block_until_ready(pallas_reshape(x, 8, 256))
    assert y2.shape == (8, 256)
    assert bool(jnp.array_equal(y2, jnp.reshape(x, (8, 256))))

    # Ragged path (total not a multiple of 128): pad + copy + slice.
    x3 = jax.random.normal(jax.random.PRNGKey(0), (3, 5, 7), dtype=jnp.float32)
    y3 = jax.block_until_ready(pallas_reshape(x3, 5, -1))
    assert y3.shape == (5, 21)
    assert bool(jnp.array_equal(y3, jnp.reshape(x3, (5, 21))))

    # bf16 input exercises the dtype-aware sublane minimum (16) and wide cols.
    xb = jax.random.normal(jax.random.PRNGKey(1), (4, 8, 32, 32), dtype=jnp.bfloat16)
    yb = jax.block_until_ready(pallas_reshape(xb, -1, 32))
    assert yb.shape == (1024, 32)
    assert bool(jnp.array_equal(yb, jnp.reshape(xb, (1024, 32))))

    print("KERNEL_OK")
</pallas_src>

<mosaic_0001>
module attributes {stable_mosaic.version = 11 : i64} {
  func.func @_copy_kernel(%arg0: i32, %arg1: memref<8x256xf32, #tpu.memory_space<vmem>>, %arg2: memref<8x256xf32, #tpu.memory_space<vmem>>) attributes {dimension_semantics = [#tpu.dimension_semantics<parallel>], iteration_bounds = array<i64: 1>, scalar_prefetch = 0 : i64, scratch_operands = 0 : i64, tpu.core_type = #tpu.core_type<tc>, window_params = [{transform_indices = @transform_0, window_bounds = array<i64: 8, 256>}, {transform_indices = @transform_1, window_bounds = array<i64: 8, 256>}]} {
    %c0 = arith.constant 0 : index
    %c0_0 = arith.constant 0 : index
    %0 = vector.load %arg1[%c0, %c0_0] : memref<8x256xf32, #tpu.memory_space<vmem>>, vector<8x256xf32>
    %c0_1 = arith.constant 0 : index
    %c0_2 = arith.constant 0 : index
    %1 = vector.load %arg2[%c0_1, %c0_2] : memref<8x256xf32, #tpu.memory_space<vmem>>, vector<8x256xf32>
    tpu.vector_store %arg2[%c0_1, %c0_2], %0 {strides = array<i32>} : memref<8x256xf32, #tpu.memory_space<vmem>>, vector<8x256xf32>,
    return
  }
  func.func @transform_0(%arg0: i32) -> (i32, i32) {
    %c0_i32 = arith.constant 0 : i32
    %c0_i32_0 = arith.constant 0 : i32
    return %arg0, %c0_i32 : i32, i32
  }
  func.func @transform_1(%arg0: i32) -> (i32, i32) {
    %c0_i32 = arith.constant 0 : i32
    %c0_i32_0 = arith.constant 0 : i32
    return %arg0, %c0_i32 : i32, i32
  }
}

</mosaic_0001>

<llo_original>
// kernel: tpu_custom_call.1
$region0: #{tpu_custom_call.1}
  #allocation0 [shape = 'u32[]', space=smem, size = 0x4, offset = 0x4, fixed_abs, tag = 'smem constant byte address 0x4 - core index']
  #allocation1 [shape = 'u32[144,128]{1,0:T(1,128)}', space=vmem, size = 0x12000, scoped, tag = 'internal scratch']
  %s0 = inlined_call_operand.hbm [shape: f32[8,256], index: 0, kind: input, shape index: {}, may-alias: {0,1}]
  %s1 = inlined_call_operand.hbm [shape: f32[8,256], index: 1, kind: output, shape index: {}, may-alias: {0,1}]
  %s2 = sld [smem:[#allocation0]]
  $region18: #{tpu_custom_call.1} parent=0
    _
  %s4 = ssub.s32 1, %s2
  %s5 = scalar_select 0, %s4, %s2
  $region1: #{tpu_custom_call.1} parent=0
    #allocation2 [shape = 'u8[8192]{0}', space=vmem, size = 0x2000, scoped, tag = 'input window, operand 0, single buffered']
    #allocation3 [shape = 's32[1]{0}', space=sflag, size = 0x4, scoped, tag = 'scoped memory for tpu_custom_call.1']
    #allocation4 [shape = 's32[1]{0}', space=sflag, size = 0x4, scoped, tag = 'scoped memory for tpu_custom_call.1']
    #allocation5 [shape = 'u8[8192]{0}', space=vmem, size = 0x2000, scoped, tag = 'output window, operand 0, single buffered']
    %6 = vsyncpa [#allocation3], 0
    %7 = vsyncpa [#allocation4], 0
    // Predicated region
    $region2: #{tpu_custom_call.1} parent=1 // pred_check
      _
    $region3: #{tpu_custom_call.1} parent=1 // pred_check_branch
      %9 = sbr.rel (0) target = $region5
    $region4: #{tpu_custom_call.1} parent=1 // pred_region
      %s11 = ssub.s32 256, 256
      %12 = vsyncadd [#allocation3], %s11
      %s14 = sshll.u32 [#allocation2], 4
      %s15 = int_to_ptr.vmem [resolvable:$true] %s14
      %17 = dma.hbm_to_vmem [thread:$0]  %s0, 256, %s15, [#allocation3]
    $region5: #{tpu_custom_call.1} parent=1 // pred_fallthru
      _
    // Predicated region
    $region6: #{tpu_custom_call.1} parent=1 // pred_check
      _
    $region7: #{tpu_custom_call.1} parent=1 // pred_check_branch
      %19 = sbr.rel (0) target = $region9
    $region8: #{tpu_custom_call.1} parent=1 // pred_region
      %20 = dma.done [#allocation3], 256
    $region9: #{tpu_custom_call.1} parent=1 // pred_fallthru
      _
    %v21 = vld [vmem:[#allocation2] sm:$0xff]
    %v22 = vld [vmem:[#allocation2 + $0x8] sm:$0xff]
    %23 = vst [vmem:[#allocation5] sm:$0xff] %v21
    %24 = vst [vmem:[#allocation5 + $0x8] sm:$0xff] %v22
    // Predicated region
    $region10: #{tpu_custom_call.1} parent=1 // pred_check
      _
    $region11: #{tpu_custom_call.1} parent=1 // pred_check_branch
      %26 = sbr.rel (0) target = $region13
    $region12: #{tpu_custom_call.1} parent=1 // pred_region
      %s28 = ssub.s32 256, 256
      %29 = vsyncadd [#allocation4], %s28
      %s31 = sshll.u32 [#allocation5], 4
      %s32 = int_to_ptr.vmem [resolvable:$true] %s31
      %34 = dma.vmem_to_hbm [thread:$0]  %s32, 256, %s1, [#allocation4]
    $region13: #{tpu_custom_call.1} parent=1 // pred_fallthru
      _
    // Predicated region
    $region14: #{tpu_custom_call.1} parent=1 // pred_check
      _
    $region15: #{tpu_custom_call.1} parent=1 // pred_check_branch
      %36 = sbr.rel (0) target = $region17
    $region16: #{tpu_custom_call.1} parent=1 // pred_region
      %37 = dma.done [#allocation4], 256
    $region17: #{tpu_custom_call.1} parent=1 // pred_fallthru
      _
    %38 = vsyncpa [#allocation3], 1
    %39 = vsyncpa [#allocation4], 1

</llo_original>
